<compile_context>
chip_gen: v7x
topology: tpu7x:2x2x1
jax: 0.10.0
libtpu: 0.0.40
codegen_flags: <defaults>
</compile_context>

<pallas_src>
import jax
import jax.numpy as jnp
from jax.experimental import pallas as pl
from jax.experimental.pallas import tpu as pltpu

_LANES = 128
# Rows per tile: multiple of 32 so the int8-backed bool outputs stay on native
# (32,128) tiling.  A 1024x128 f32 tile => ~6 MB of live VMEM for
# (1 input + 4 f32 outputs + 3 bool outputs) double-buffered, which fits the
# default scoped VMEM budget on v5e (16 MiB), v6e (32 MiB) and v7x (32 MiB).
_MAX_TILE_ROWS = 1024


def _elementwise_kernel(x_ref,
                        add_ref, sub_ref, mul_ref, div_ref,
                        gt_ref, lt_ref, eq_ref):
    x = x_ref[...]
    add_ref[...] = x + 2.0
    sub_ref[...] = x - 3.0
    mul_ref[...] = x * 4.0
    div_ref[...] = x / 5.0
    # Comparisons stored directly as bool -> no wrapper-side astype pass.
    gt_ref[...] = x > 1.0
    lt_ref[...] = x < 5.0
    eq_ref[...] = x == 2.0


def _round_up(a, b):
    return (a + b - 1) // b * b


def pt_module_forward(x):
    orig_shape = x.shape
    dtype = x.dtype
    n = x.size

    # Flatten to lane-dense (rows, 128); pad so rows divides evenly into tiles.
    rows_needed = _round_up(n, _LANES) // _LANES
    tile_rows = min(_MAX_TILE_ROWS, _round_up(rows_needed, 32))
    rows = _round_up(rows_needed, tile_rows)
    padded = rows * _LANES

    flat = x.reshape(-1)
    if padded != n:
        flat = jnp.pad(flat, (0, padded - n))
    x2d = flat.reshape(rows, _LANES)

    grid = (rows // tile_rows,)
    spec = lambda: pl.BlockSpec((tile_rows, _LANES), lambda i: (i, 0))

    out_shapes = (
        jax.ShapeDtypeStruct((rows, _LANES), dtype),      # addition
        jax.ShapeDtypeStruct((rows, _LANES), dtype),      # subtraction
        jax.ShapeDtypeStruct((rows, _LANES), dtype),      # multiplication
        jax.ShapeDtypeStruct((rows, _LANES), dtype),      # division
        jax.ShapeDtypeStruct((rows, _LANES), jnp.bool_),  # greater_than
        jax.ShapeDtypeStruct((rows, _LANES), jnp.bool_),  # less_than
        jax.ShapeDtypeStruct((rows, _LANES), jnp.bool_),  # equal_to
    )

    outs = pl.pallas_call(
        _elementwise_kernel,
        out_shape=out_shapes,
        grid=grid,
        in_specs=[spec()],
        out_specs=tuple(spec() for _ in out_shapes),
        compiler_params=pltpu.CompilerParams(
            dimension_semantics=("parallel",)),
    )(x2d)

    def unflatten(o):
        if padded != n:
            o = o.reshape(-1)[:n]
        return o.reshape(orig_shape)

    return tuple(unflatten(o) for o in outs)


if __name__ == "__main__":
    key = jax.random.PRNGKey(0)
    x = jax.random.normal(key, (2, 4, 16, 16), dtype=jnp.float32) * 3.0

    outs = jax.block_until_ready(pt_module_forward(x))

    # Sanity check against plain JAX reference (matches the PyTorch forward).
    ref = (x + 2, x - 3, x * 4, x / 5, x > 1, x < 5, x == 2)
    for got, want in zip(outs, ref):
        assert got.shape == want.shape, (got.shape, want.shape)
        assert got.dtype == want.dtype, (got.dtype, want.dtype)
        assert jnp.array_equal(got, want), "mismatch vs reference"

    print("KERNEL_OK")
</pallas_src>

<mosaic_0001>
module attributes {stable_mosaic.version = 11 : i64} {
  func.func @_elementwise_kernel(%arg0: i32, %arg1: memref<32x128xf32, #tpu.memory_space<vmem>>, %arg2: memref<32x128xf32, #tpu.memory_space<vmem>>, %arg3: memref<32x128xf32, #tpu.memory_space<vmem>>, %arg4: memref<32x128xf32, #tpu.memory_space<vmem>>, %arg5: memref<32x128xf32, #tpu.memory_space<vmem>>, %arg6: memref<32x128xi32, #tpu.memory_space<vmem>>, %arg7: memref<32x128xi32, #tpu.memory_space<vmem>>, %arg8: memref<32x128xi32, #tpu.memory_space<vmem>>) attributes {dimension_semantics = [#tpu.dimension_semantics<parallel>], iteration_bounds = array<i64: 1>, scalar_prefetch = 0 : i64, scratch_operands = 0 : i64, tpu.core_type = #tpu.core_type<tc>, window_params = [{transform_indices = @transform_0, window_bounds = array<i64: 32, 128>}, {transform_indices = @transform_1, window_bounds = array<i64: 32, 128>}, {transform_indices = @transform_2, window_bounds = array<i64: 32, 128>}, {transform_indices = @transform_3, window_bounds = array<i64: 32, 128>}, {transform_indices = @transform_4, window_bounds = array<i64: 32, 128>}, {transform_indices = @transform_5, window_bounds = array<i64: 32, 128>}, {transform_indices = @transform_6, window_bounds = array<i64: 32, 128>}, {transform_indices = @transform_7, window_bounds = array<i64: 32, 128>}]} {
    %c0 = arith.constant 0 : index
    %c0_0 = arith.constant 0 : index
    %0 = vector.load %arg1[%c0, %c0_0] : memref<32x128xf32, #tpu.memory_space<vmem>>, vector<32x128xf32>
    %cst = arith.constant 2.000000e+00 : f32
    %1 = vector.broadcast %cst : f32 to vector<32x128xf32>
    %2 = arith.addf %0, %1 : vector<32x128xf32>
    %c0_1 = arith.constant 0 : index
    %c0_2 = arith.constant 0 : index
    %3 = vector.load %arg2[%c0_1, %c0_2] : memref<32x128xf32, #tpu.memory_space<vmem>>, vector<32x128xf32>
    tpu.vector_store %arg2[%c0_1, %c0_2], %2 {strides = array<i32>} : memref<32x128xf32, #tpu.memory_space<vmem>>, vector<32x128xf32>,
    %cst_3 = arith.constant 3.000000e+00 : f32
    %4 = vector.broadcast %cst_3 : f32 to vector<32x128xf32>
    %5 = arith.subf %0, %4 : vector<32x128xf32>
    %c0_4 = arith.constant 0 : index
    %c0_5 = arith.constant 0 : index
    %6 = vector.load %arg3[%c0_4, %c0_5] : memref<32x128xf32, #tpu.memory_space<vmem>>, vector<32x128xf32>
    tpu.vector_store %arg3[%c0_4, %c0_5], %5 {strides = array<i32>} : memref<32x128xf32, #tpu.memory_space<vmem>>, vector<32x128xf32>,
    %cst_6 = arith.constant 4.000000e+00 : f32
    %7 = vector.broadcast %cst_6 : f32 to vector<32x128xf32>
    %8 = arith.mulf %0, %7 : vector<32x128xf32>
    %c0_7 = arith.constant 0 : index
    %c0_8 = arith.constant 0 : index
    %9 = vector.load %arg4[%c0_7, %c0_8] : memref<32x128xf32, #tpu.memory_space<vmem>>, vector<32x128xf32>
    tpu.vector_store %arg4[%c0_7, %c0_8], %8 {strides = array<i32>} : memref<32x128xf32, #tpu.memory_space<vmem>>, vector<32x128xf32>,
    %cst_9 = arith.constant 5.000000e+00 : f32
    %10 = vector.broadcast %cst_9 : f32 to vector<32x128xf32>
    %11 = arith.divf %0, %10 : vector<32x128xf32>
    %c0_10 = arith.constant 0 : index
    %c0_11 = arith.constant 0 : index
    %12 = vector.load %arg5[%c0_10, %c0_11] : memref<32x128xf32, #tpu.memory_space<vmem>>, vector<32x128xf32>
    tpu.vector_store %arg5[%c0_10, %c0_11], %11 {strides = array<i32>} : memref<32x128xf32, #tpu.memory_space<vmem>>, vector<32x128xf32>,
    %cst_12 = arith.constant 1.000000e+00 : f32
    %13 = vector.broadcast %cst_12 : f32 to vector<32x128xf32>
    %14 = arith.cmpf ogt, %0, %13 : vector<32x128xf32>
    %c0_13 = arith.constant 0 : index
    %c0_14 = arith.constant 0 : index
    %15 = vector.load %arg6[%c0_13, %c0_14] : memref<32x128xi32, #tpu.memory_space<vmem>>, vector<32x128xi32>
    %16 = arith.extui %14 : vector<32x128xi1> to vector<32x128xi32>
    %cst_15 = arith.constant dense<0> : vector<32x128xi32>
    %17 = arith.cmpi ne, %15, %cst_15 : vector<32x128xi32>
    tpu.vector_store %arg6[%c0_13, %c0_14], %16 {strides = array<i32>} : memref<32x128xi32, #tpu.memory_space<vmem>>, vector<32x128xi32>,
    %cst_16 = arith.constant 5.000000e+00 : f32
    %18 = vector.broadcast %cst_16 : f32 to vector<32x128xf32>
    %19 = arith.cmpf olt, %0, %18 : vector<32x128xf32>
    %c0_17 = arith.constant 0 : index
    %c0_18 = arith.constant 0 : index
    %20 = vector.load %arg7[%c0_17, %c0_18] : memref<32x128xi32, #tpu.memory_space<vmem>>, vector<32x128xi32>
    %21 = arith.extui %19 : vector<32x128xi1> to vector<32x128xi32>
    %cst_19 = arith.constant dense<0> : vector<32x128xi32>
    %22 = arith.cmpi ne, %20, %cst_19 : vector<32x128xi32>
    tpu.vector_store %arg7[%c0_17, %c0_18], %21 {strides = array<i32>} : memref<32x128xi32, #tpu.memory_space<vmem>>, vector<32x128xi32>,
    %cst_20 = arith.constant 2.000000e+00 : f32
    %23 = vector.broadcast %cst_20 : f32 to vector<32x128xf32>
    %24 = arith.cmpf oeq, %0, %23 : vector<32x128xf32>
    %c0_21 = arith.constant 0 : index
    %c0_22 = arith.constant 0 : index
    %25 = vector.load %arg8[%c0_21, %c0_22] : memref<32x128xi32, #tpu.memory_space<vmem>>, vector<32x128xi32>
    %26 = arith.extui %24 : vector<32x128xi1> to vector<32x128xi32>
    %cst_23 = arith.constant dense<0> : vector<32x128xi32>
    %27 = arith.cmpi ne, %25, %cst_23 : vector<32x128xi32>
    tpu.vector_store %arg8[%c0_21, %c0_22], %26 {strides = array<i32>} : memref<32x128xi32, #tpu.memory_space<vmem>>, vector<32x128xi32>,
    return
  }
  func.func @transform_0(%arg0: i32) -> (i32, i32) {
    %c0_i32 = arith.constant 0 : i32
    %c0_i32_0 = arith.constant 0 : i32
    return %arg0, %c0_i32 : i32, i32
  }
  func.func @transform_1(%arg0: i32) -> (i32, i32) {
    %c0_i32 = arith.constant 0 : i32
    %c0_i32_0 = arith.constant 0 : i32
    return %arg0, %c0_i32 : i32, i32
  }
  func.func @transform_2(%arg0: i32) -> (i32, i32) {
    %c0_i32 = arith.constant 0 : i32
    %c0_i32_0 = arith.constant 0 : i32
    return %arg0, %c0_i32 : i32, i32
  }
  func.func @transform_3(%arg0: i32) -> (i32, i32) {
    %c0_i32 = arith.constant 0 : i32
    %c0_i32_0 = arith.constant 0 : i32
    return %arg0, %c0_i32 : i32, i32
  }
  func.func @transform_4(%arg0: i32) -> (i32, i32) {
    %c0_i32 = arith.constant 0 : i32
    %c0_i32_0 = arith.constant 0 : i32
    return %arg0, %c0_i32 : i32, i32
  }
  func.func @transform_5(%arg0: i32) -> (i32, i32) {
    %c0_i32 = arith.constant 0 : i32
    %c0_i32_0 = arith.constant 0 : i32
    return %arg0, %c0_i32 : i32, i32
  }
  func.func @transform_6(%arg0: i32) -> (i32, i32) {
    %c0_i32 = arith.constant 0 : i32
    %c0_i32_0 = arith.constant 0 : i32
    return %arg0, %c0_i32 : i32, i32
  }
  func.func @transform_7(%arg0: i32) -> (i32, i32) {
    %c0_i32 = arith.constant 0 : i32
    %c0_i32_0 = arith.constant 0 : i32
    return %arg0, %c0_i32 : i32, i32
  }
}

</mosaic_0001>

<llo_original>
// kernel: tpu_custom_call.1
$region0: #{tpu_custom_call.1}
  #allocation0 [shape = 'u32[]', space=smem, size = 0x4, offset = 0x4, fixed_abs, tag = 'smem constant byte address 0x4 - core index']
  #allocation1 [shape = 'u32[144,128]{1,0:T(1,128)}', space=vmem, size = 0x12000, scoped, tag = 'internal scratch']
  %s0 = inlined_call_operand.hbm [shape: f32[32,128], index: 0, kind: input, shape index: {}]
  %s1 = inlined_call_operand.hbm [shape: f32[32,128], index: 1, kind: output, shape index: {0}]
  %s2 = inlined_call_operand.hbm [shape: f32[32,128], index: 2, kind: output, shape index: {1}]
  %s3 = inlined_call_operand.hbm [shape: f32[32,128], index: 3, kind: output, shape index: {2}]
  %s4 = inlined_call_operand.hbm [shape: f32[32,128], index: 4, kind: output, shape index: {3}]
  %s5 = inlined_call_operand.vmem [shape: s32[32,128], index: 5, kind: output, shape index: {4}]
  %s6 = inlined_call_operand.vmem [shape: s32[32,128], index: 6, kind: output, shape index: {5}]
  %s7 = inlined_call_operand.vmem [shape: s32[32,128], index: 7, kind: output, shape index: {6}]
  %8 = xla_tuple %s1, %s2, %s3, %s4, %s5, %s6, %s7
  %s9 = sld [smem:[#allocation0]]
  $region66: #{tpu_custom_call.1} parent=0
    _
  %s11 = ssub.s32 1, %s9
  %s12 = scalar_select 0, %s11, %s9
  $region1: #{tpu_custom_call.1} parent=0
    #allocation2 [shape = 'u8[16384]{0}', space=vmem, size = 0x4000, scoped, tag = 'input window, operand 0, single buffered']
    #allocation3 [shape = 's32[1]{0}', space=sflag, size = 0x4, scoped, tag = 'scoped memory for tpu_custom_call.1']
    #allocation4 [shape = 's32[1]{0}', space=sflag, size = 0x4, scoped, tag = 'scoped memory for tpu_custom_call.1']
    #allocation5 [shape = 'u8[16384]{0}', space=vmem, size = 0x4000, scoped, tag = 'output window, operand 0, single buffered']
    #allocation6 [shape = 'u8[16384]{0}', space=vmem, size = 0x4000, scoped, tag = 'output window, operand 1, single buffered']
    #allocation7 [shape = 's32[1]{0}', space=sflag, size = 0x4, scoped, tag = 'scoped memory for tpu_custom_call.1']
    #allocation8 [shape = 'u8[16384]{0}', space=vmem, size = 0x4000, scoped, tag = 'output window, operand 2, single buffered']
    #allocation9 [shape = 'u8[16384]{0}', space=vmem, size = 0x4000, scoped, tag = 'output window, operand 3, single buffered']
    #allocation10 [shape = 's32[1]{0}', space=sflag, size = 0x4, scoped, tag = 'scoped memory for tpu_custom_call.1']
    %13 = vsyncpa [#allocation3], 0
    %14 = vsyncpa [#allocation4], 0
    %15 = vsyncpa [#allocation7], 0
    %16 = vsyncpa [#allocation10], 0
    // Predicated region
    $region2: #{tpu_custom_call.1} parent=1 // pred_check
      _
    $region3: #{tpu_custom_call.1} parent=1 // pred_check_branch
      %18 = sbr.rel (0) target = $region5
    $region4: #{tpu_custom_call.1} parent=1 // pred_region
      %s20 = ssub.s32 512, 512
      %21 = vsyncadd [#allocation3], %s20
      %s22 = sshll.u32 [#allocation2], 4
      %s23 = int_to_ptr.vmem [resolvable:$true] %s22
      %28 = dma.hbm_to_vmem [thread:$0]  %s0, 512, %s23, [#allocation3], 128, 128, 8
    $region5: #{tpu_custom_call.1} parent=1 // pred_fallthru
      _
    // Predicated region
    $region6: #{tpu_custom_call.1} parent=1 // pred_check
      _
    $region7: #{tpu_custom_call.1} parent=1 // pred_check_branch
      %30 = sbr.rel (0) target = $region9
    $region8: #{tpu_custom_call.1} parent=1 // pred_region
      %31 = dma.done [#allocation3], 512
    $region9: #{tpu_custom_call.1} parent=1 // pred_fallthru
      _
    %v32 = vld [vmem:[#allocation2] sm:$0xff]
    %v33 = vld [vmem:[#allocation2 + $0x8] sm:$0xff]
    %v34 = vld [vmem:[#allocation2 + $0x10] sm:$0xff]
    %v35 = vld [vmem:[#allocation2 + $0x18] sm:$0xff]
    %v36 = vadd.f32 %v32, 2.0
    %v37 = vadd.f32 %v33, 2.0
    %v38 = vadd.f32 %v34, 2.0
    %v39 = vadd.f32 %v35, 2.0
    %40 = vst [vmem:[#allocation5] sm:$0xff] %v36
    %41 = vst [vmem:[#allocation5 + $0x8] sm:$0xff] %v37
    %42 = vst [vmem:[#allocation5 + $0x10] sm:$0xff] %v38
    %43 = vst [vmem:[#allocation5 + $0x18] sm:$0xff] %v39
    %v44 = vsub.f32 %v32, 3.0
    %v45 = vsub.f32 %v33, 3.0
    %v46 = vsub.f32 %v34, 3.0
    %v47 = vsub.f32 %v35, 3.0
    %48 = vst [vmem:[#allocation6] sm:$0xff] %v44
    %49 = vst [vmem:[#allocation6 + $0x8] sm:$0xff] %v45
    %50 = vst [vmem:[#allocation6 + $0x10] sm:$0xff] %v46
    %51 = vst [vmem:[#allocation6 + $0x18] sm:$0xff] %v47
    %v52 = vmul.f32 %v32, 4.0
    %v53 = vmul.f32 %v33, 4.0
    %v54 = vmul.f32 %v34, 4.0
    %v55 = vmul.f32 %v35, 4.0
    %56 = vst [vmem:[#allocation8] sm:$0xff] %v52
    %57 = vst [vmem:[#allocation8 + $0x8] sm:$0xff] %v53
    %58 = vst [vmem:[#allocation8 + $0x10] sm:$0xff] %v54
    %59 = vst [vmem:[#allocation8 + $0x18] sm:$0xff] %v55
    %v60 = vrcp.pop 5.0
    %v61 = vmul.f32 %v32, %v60
    %v62 = vmul.f32 %v33, %v60
    %v63 = vmul.f32 %v34, %v60
    %v64 = vmul.f32 %v35, %v60
    %65 = vst [vmem:[#allocation9] sm:$0xff] %v61
    %66 = vst [vmem:[#allocation9 + $0x8] sm:$0xff] %v62
    %67 = vst [vmem:[#allocation9 + $0x10] sm:$0xff] %v63
    %68 = vst [vmem:[#allocation9 + $0x18] sm:$0xff] %v64
    %vm69 = vcmp.gt.f32.partialorder %v32, 1.0
    %vm70 = vcmp.gt.f32.partialorder %v33, 1.0
    %vm71 = vcmp.gt.f32.partialorder %v34, 1.0
    %vm72 = vcmp.gt.f32.partialorder %v35, 1.0
    %v73 = vsel %vm69, 1, 0
    %v74 = vsel %vm70, 1, 0
    %v75 = vsel %vm71, 1, 0
    %v76 = vsel %vm72, 1, 0
    %77 = vst [vmem:[%s5] sm:$0xff] %v73
    %78 = vst [vmem:[%s5 + $0x8] sm:$0xff] %v74
    %79 = vst [vmem:[%s5 + $0x10] sm:$0xff] %v75
    %80 = vst [vmem:[%s5 + $0x18] sm:$0xff] %v76
    %vm81 = vcmp.lt.f32.partialorder %v32, 5.0
    %vm82 = vcmp.lt.f32.partialorder %v33, 5.0
    %vm83 = vcmp.lt.f32.partialorder %v34, 5.0
    %vm84 = vcmp.lt.f32.partialorder %v35, 5.0
    %v85 = vsel %vm81, 1, 0
    %v86 = vsel %vm82, 1, 0
    %v87 = vsel %vm83, 1, 0
    %v88 = vsel %vm84, 1, 0
    %89 = vst [vmem:[%s6] sm:$0xff] %v85
    %90 = vst [vmem:[%s6 + $0x8] sm:$0xff] %v86
    %91 = vst [vmem:[%s6 + $0x10] sm:$0xff] %v87
    %92 = vst [vmem:[%s6 + $0x18] sm:$0xff] %v88
    %vm93 = vcmp.eq.f32.partialorder %v32, 2.0
    %vm94 = vcmp.eq.f32.partialorder %v33, 2.0
    %vm95 = vcmp.eq.f32.partialorder %v34, 2.0
    %vm96 = vcmp.eq.f32.partialorder %v35, 2.0
    %v97 = vsel %vm93, 1, 0
    %v98 = vsel %vm94, 1, 0
    %v99 = vsel %vm95, 1, 0
    %v100 = vsel %vm96, 1, 0
    %101 = vst [vmem:[%s7] sm:$0xff] %v97
    %102 = vst [vmem:[%s7 + $0x8] sm:$0xff] %v98
    %103 = vst [vmem:[%s7 + $0x10] sm:$0xff] %v99
    %104 = vst [vmem:[%s7 + $0x18] sm:$0xff] %v100
    // Predicated region
    $region10: #{tpu_custom_call.1} parent=1 // pred_check
      _
    $region11: #{tpu_custom_call.1} parent=1 // pred_check_branch
      %106 = sbr.rel (0) target = $region13
    $region12: #{tpu_custom_call.1} parent=1 // pred_region
      %s108 = ssub.s32 512, 512
      %109 = vsyncadd [#allocation4], %s108
      %s110 = sshll.u32 [#allocation5], 4
      %s111 = int_to_ptr.vmem [resolvable:$true] %s110
      %116 = dma.vmem_to_hbm [thread:$0]  %s111, 512, %s1, [#allocation4], 128, 128, 8
    $region13: #{tpu_custom_call.1} parent=1 // pred_fallthru
      _
    // Predicated region
    $region14: #{tpu_custom_call.1} parent=1 // pred_check
      _
    $region15: #{tpu_custom_call.1} parent=1 // pred_check_branch
      %118 = sbr.rel (0) target = $region17
    $region16: #{tpu_custom_call.1} parent=1 // pred_region
      %s120 = ssub.s32 512, 512
      %121 = vsyncadd [#allocation7], %s120
      %s122 = sshll.u32 [#allocation6], 4
      %s123 = int_to_ptr.vmem [resolvable:$true] %s122
      %128 = dma.vmem_to_hbm [thread:$0]  %s123, 512, %s2, [#allocation7], 128, 128, 8
    $region17: #{tpu_custom_call.1} parent=1 // pred_fallthru
      _
    // Predicated region
    $region18: #{tpu_custom_call.1} parent=1 // pred_check
      _
    $region19: #{tpu_custom_call.1} parent=1 // pred_check_branch
      %130 = sbr.rel (0) target = $region21
    $region20: #{tpu_custom_call.1} parent=1 // pred_region
      %s132 = ssub.s32 512, 512
      %133 = vsyncadd [#allocation7], %s132
      %s134 = sshll.u32 [#allocation8], 4
      %s135 = int_to_ptr.vmem [resolvable:$true] %s134
      %140 = dma.vmem_to_hbm [thread:$0]  %s135, 512, %s3, [#allocation7], 128, 128, 8
    $region21: #{tpu_custom_call.1} parent=1 // pred_fallthru
      _
    // Predicated region
    $region22: #{tpu_custom_call.1} parent=1 // pred_check
      _
    $region23: #{tpu_custom_call.1} parent=1 // pred_check_branch
      %142 = sbr.rel (0) target = $region25
    $region24: #{tpu_custom_call.1} parent=1 // pred_region
      %s144 = ssub.s32 512, 512
      %145 = vsyncadd [#allocation10], %s144
      %s146 = sshll.u32 [#allocation9], 4
      %s147 = int_to_ptr.vmem [resolvable:$true] %s146
      %152 = dma.vmem_to_hbm [thread:$0]  %s147, 512, %s4, [#allocation10], 128, 128, 8
    $region25: #{tpu_custom_call.1} parent=1 // pred_fallthru
      _
    // Predicated region
    $region26: #{tpu_custom_call.1} parent=1 // pred_check
      _
    $region27: #{tpu_custom_call.1} parent=1 // pred_check_branch
      %154 = sbr.rel (0) target = $region29
    $region28: #{tpu_custom_call.1} parent=1 // pred_region
      _
    $region29: #{tpu_custom_call.1} parent=1 // pred_fallthru
      _
    // Predicated region
    $region30: #{tpu_custom_call.1} parent=1 // pred_check
      _
    $region31: #{tpu_custom_call.1} parent=1 // pred_check_branch
      %156 = sbr.rel (0) target = $region33
    $region32: #{tpu_custom_call.1} parent=1 // pred_region
      _
    $region33: #{tpu_custom_call.1} parent=1 // pred_fallthru
      _
    // Predicated region
    $region34: #{tpu_custom_call.1} parent=1 // pred_check
      _
    $region35: #{tpu_custom_call.1} parent=1 // pred_check_branch
      %158 = sbr.rel (0) target = $region37
    $region36: #{tpu_custom_call.1} parent=1 // pred_region
      _
    $region37: #{tpu_custom_call.1} parent=1 // pred_fallthru
      _
    // Predicated region
    $region38: #{tpu_custom_call.1} parent=1 // pred_check
      _
    $region39: #{tpu_custom_call.1} parent=1 // pred_check_branch
      %160 = sbr.rel (0) target = $region41
    $region40: #{tpu_custom_call.1} parent=1 // pred_region
      %161 = dma.done [#allocation4], 512
    $region41: #{tpu_custom_call.1} parent=1 // pred_fallthru
      _
    // Predicated region
    $region42: #{tpu_custom_call.1} parent=1 // pred_check
      _
    $region43: #{tpu_custom_call.1} parent=1 // pred_check_branch
      %163 = sbr.rel (0) target = $region45
    $region44: #{tpu_custom_call.1} parent=1 // pred_region
      %164 = dma.done [#allocation7], 512
    $region45: #{tpu_custom_call.1} parent=1 // pred_fallthru
      _
    // Predicated region
    $region46: #{tpu_custom_call.1} parent=1 // pred_check
      _
    $region47: #{tpu_custom_call.1} parent=1 // pred_check_branch
      %166 = sbr.rel (0) target = $region49
    $region48: #{tpu_custom_call.1} parent=1 // pred_region
      %167 = dma.done [#allocation7], 512
    $region49: #{tpu_custom_call.1} parent=1 // pred_fallthru
      _
    // Predicated region
    $region50: #{tpu_custom_call.1} parent=1 // pred_check
      _
    $region51: #{tpu_custom_call.1} parent=1 // pred_check_branch
      %169 = sbr.rel (0) target = $region53
    $region52: #{tpu_custom_call.1} parent=1 // pred_region
      %170 = dma.done [#allocation10], 512
    $region53: #{tpu_custom_call.1} parent=1 // pred_fallthru
      _
    // Predicated region
    $region54: #{tpu_custom_call.1} parent=1 // pred_check
      _
    $region55: #{tpu_custom_call.1} parent=1 // pred_check_branch
      %172 = sbr.rel (0) target = $region57
    $region56: #{tpu_custom_call.1} parent=1 // pred_region
      _
    $region57: #{tpu_custom_call.1} parent=1 // pred_fallthru
      _
    // Predicated region
    $region58: #{tpu_custom_call.1} parent=1 // pred_check
      _
    $region59: #{tpu_custom_call.1} parent=1 // pred_check_branch
      %174 = sbr.rel (0) target = $region61
    $region60: #{tpu_custom_call.1} parent=1 // pred_region
      _
    $region61: #{tpu_custom_call.1} parent=1 // pred_fallthru
      _
    // Predicated region
    $region62: #{tpu_custom_call.1} parent=1 // pred_check
      _
    $region63: #{tpu_custom_call.1} parent=1 // pred_check_branch
      %176 = sbr.rel (0) target = $region65
    $region64: #{tpu_custom_call.1} parent=1 // pred_region
      _
    $region65: #{tpu_custom_call.1} parent=1 // pred_fallthru
      _
    %177 = vsyncpa [#allocation3], 1
    %178 = vsyncpa [#allocation4], 1
    %179 = vsyncpa [#allocation7], 1
    %180 = vsyncpa [#allocation10], 1

</llo_original>
